<compile_context>
chip_gen: v5e
topology: v5e:2x2
jax: 0.10.0
libtpu: 0.0.40
codegen_flags: <defaults>
</compile_context>

<pallas_src>
import functools

import jax
import jax.numpy as jnp
from jax import lax
from jax.experimental import pallas as pl
from jax.experimental.pallas import tpu as pltpu

NEG_SLOPE = 0.2
BN_EPS = 1e-5


# --------------------------------------------------------------------------
# Kernel 1: transform conv (stride == kernel => patch matmul) + LeakyReLU,
#           plus per-channel sum / sumsq accumulation for the transform BN.
# --------------------------------------------------------------------------
def _transform_kernel(cpat_ref, wt_ref, bt_ref, ct_ref, s_ref, ss_ref):
    b = pl.program_id(0)
    h = jnp.dot(cpat_ref[0], wt_ref[...],
                preferred_element_type=jnp.float32) + bt_ref[...]
    a = jnp.maximum(h, NEG_SLOPE * h)            # LeakyReLU(0.2)
    ct_ref[0] = a

    @pl.when(b == 0)
    def _():
        s_ref[...] = jnp.zeros_like(s_ref)
        ss_ref[...] = jnp.zeros_like(ss_ref)

    s_ref[...] += jnp.sum(a, axis=0, keepdims=True)
    ss_ref[...] += jnp.sum(a * a, axis=0, keepdims=True)


# --------------------------------------------------------------------------
# Kernel 2: apply transform-BN (q), k/v projections, attention, residual add,
#           LeakyReLU, plus per-channel sum / sumsq for the final BN.
# --------------------------------------------------------------------------
def _attn_kernel(ct_ref, s1_ref, ss1_ref, g1_ref, b1_ref, x_ref,
                 wk_ref, bk_ref, wv_ref, bv_ref,
                 y_ref, s2_ref, ss2_ref, *, count):
    b = pl.program_id(0)

    inv_cnt = 1.0 / count
    mean = s1_ref[...] * inv_cnt
    var = ss1_ref[...] * inv_cnt - mean * mean
    scale = g1_ref[...] * lax.rsqrt(var + BN_EPS)
    shift = b1_ref[...] - mean * scale

    q = ct_ref[0] * scale + shift                                   # (n, dim)
    x = x_ref[0]                                                    # (n, dim)
    k = jnp.dot(x, wk_ref[...], preferred_element_type=jnp.float32) + bk_ref[...]
    v = jnp.dot(x, wv_ref[...], preferred_element_type=jnp.float32) + bv_ref[...]

    # attention logits q @ k^T: contract the channel dim of both operands (MXU)
    s = lax.dot_general(q, k, (((1,), (1,)), ((), ())),
                        preferred_element_type=jnp.float32)         # (n, n)
    m = jnp.max(s, axis=-1, keepdims=True)
    p = jnp.exp(s - m)
    attn = p / jnp.sum(p, axis=-1, keepdims=True)
    o = jnp.dot(attn, v, preferred_element_type=jnp.float32)        # (n, dim)

    yv = o + x                                                      # out += res
    yv = jnp.maximum(yv, NEG_SLOPE * yv)                            # LeakyReLU(0.2)
    y_ref[0] = yv

    @pl.when(b == 0)
    def _():
        s2_ref[...] = jnp.zeros_like(s2_ref)
        ss2_ref[...] = jnp.zeros_like(ss2_ref)

    s2_ref[...] += jnp.sum(yv, axis=0, keepdims=True)
    ss2_ref[...] += jnp.sum(yv * yv, axis=0, keepdims=True)


# --------------------------------------------------------------------------
# Kernel 3: apply the final BatchNorm from the accumulated moments.
# --------------------------------------------------------------------------
def _bn_kernel(y_ref, s_ref, ss_ref, g_ref, b_ref, o_ref, *, count):
    inv_cnt = 1.0 / count
    mean = s_ref[...] * inv_cnt
    var = ss_ref[...] * inv_cnt - mean * mean
    scale = g_ref[...] * lax.rsqrt(var + BN_EPS)
    shift = b_ref[...] - mean * scale
    o_ref[0] = y_ref[0] * scale + shift


def res_attn_block(x_nchw, c_nchw, params, *, du):
    """x_nchw: (B, dim, H, W), c_nchw: (B, ced, H*du, W*du). Returns NCHW out."""
    wt, bt = params["wt"], params["bt"]          # (du, du, ced, dim), (dim,)
    g1, b1 = params["gamma1"], params["beta1"]   # transform BN
    wk, bk = params["wk"], params["bk"]          # (dim, dim), (dim,)
    wv, bv = params["wv"], params["bv"]
    g2, b2 = params["gamma2"], params["beta2"]   # final BN

    B, dim, H, W = x_nchw.shape
    n = H * W
    ced = c_nchw.shape[1]
    P = du * du * ced
    count = float(B * n)                         # BN count over (N, H, W)
    f32 = jnp.float32

    # ---- glue: layout changes only (no read amplification) ----
    x_seq = jnp.transpose(x_nchw, (0, 2, 3, 1)).reshape(B, n, dim).astype(f32)
    c_nhwc = jnp.transpose(c_nchw, (0, 2, 3, 1)).astype(f32)
    cpat = c_nhwc.reshape(B, H, du, W, du, ced)
    cpat = jnp.transpose(cpat, (0, 1, 3, 2, 4, 5)).reshape(B, n, P)
    wt_mat = wt.reshape(P, dim).astype(f32)

    def row(v):
        return v.reshape(1, dim).astype(f32)

    vec_spec = pl.BlockSpec((1, dim), lambda b: (0, 0))
    seq_spec = pl.BlockSpec((1, n, dim), lambda b: (b, 0, 0))
    vec_shape = jax.ShapeDtypeStruct((1, dim), f32)
    seq_shape = jax.ShapeDtypeStruct((B, n, dim), f32)

    # ---- kernel 1: patch-conv + LeakyReLU + BN1 partial sums ----
    ct, s1, ss1 = pl.pallas_call(
        _transform_kernel,
        grid=(B,),
        in_specs=[pl.BlockSpec((1, n, P), lambda b: (b, 0, 0)),
                  pl.BlockSpec((P, dim), lambda b: (0, 0)),
                  vec_spec],
        out_specs=[seq_spec, vec_spec, vec_spec],
        out_shape=[seq_shape, vec_shape, vec_shape],
        compiler_params=pltpu.CompilerParams(
            dimension_semantics=("arbitrary",)),
    )(cpat, wt_mat, row(bt))

    # ---- kernel 2: q = BN1(ct), k/v, attention, residual, LeakyReLU, BN2 sums ----
    y, s2, ss2 = pl.pallas_call(
        functools.partial(_attn_kernel, count=count),
        grid=(B,),
        in_specs=[seq_spec,                                   # ct
                  vec_spec, vec_spec, vec_spec, vec_spec,     # s1, ss1, gamma1, beta1
                  seq_spec,                                   # x_seq
                  pl.BlockSpec((dim, dim), lambda b: (0, 0)), vec_spec,   # wk, bk
                  pl.BlockSpec((dim, dim), lambda b: (0, 0)), vec_spec],  # wv, bv
        out_specs=[seq_spec, vec_spec, vec_spec],
        out_shape=[seq_shape, vec_shape, vec_shape],
        compiler_params=pltpu.CompilerParams(
            dimension_semantics=("arbitrary",)),
    )(ct, s1, ss1, row(g1), row(b1), x_seq,
      wk.astype(f32), row(bk), wv.astype(f32), row(bv))

    # ---- kernel 3: final BN apply (independent per batch -> parallel) ----
    out = pl.pallas_call(
        functools.partial(_bn_kernel, count=count),
        grid=(B,),
        in_specs=[seq_spec, vec_spec, vec_spec, vec_spec, vec_spec],
        out_specs=seq_spec,
        out_shape=seq_shape,
        compiler_params=pltpu.CompilerParams(
            dimension_semantics=("parallel",)),
    )(y, s2, ss2, row(g2), row(b2))

    return jnp.transpose(out.reshape(B, H, W, dim), (0, 3, 1, 2))


def reference(x_nchw, c_nchw, params, *, du):
    """Pure-JAX reference of the PyTorch forward (NCHW in/out, training-mode BN)."""
    wt, bt = params["wt"], params["bt"]
    g1, b1 = params["gamma1"], params["beta1"]
    wk, bk = params["wk"], params["bk"]
    wv, bv = params["wv"], params["bv"]
    g2, b2 = params["gamma2"], params["beta2"]

    B, dim, H, W = x_nchw.shape
    n = H * W
    x = jnp.transpose(x_nchw, (0, 2, 3, 1)).reshape(B, n, dim)
    c = jnp.transpose(c_nchw, (0, 2, 3, 1))

    dn = ("NHWC", "HWIO", "NHWC")
    ct = lax.conv_general_dilated(c, wt, (du, du), "VALID",
                                  dimension_numbers=dn) + bt
    ct = jnp.maximum(ct, NEG_SLOPE * ct)
    mean1 = jnp.mean(ct, axis=(0, 1, 2), keepdims=True)
    var1 = jnp.mean((ct - mean1) ** 2, axis=(0, 1, 2), keepdims=True)
    q = ((ct - mean1) * lax.rsqrt(var1 + BN_EPS) * g1 + b1).reshape(B, n, dim)

    k = x @ wk + bk
    v = x @ wv + bv
    s = jnp.einsum("bnd,bmd->bnm", q, k)
    attn = jax.nn.softmax(s, axis=-1)
    o = jnp.einsum("bnm,bmd->bnd", attn, v)

    y = o + x
    y = jnp.maximum(y, NEG_SLOPE * y)
    mean2 = jnp.mean(y, axis=(0, 1), keepdims=True)
    var2 = jnp.mean((y - mean2) ** 2, axis=(0, 1), keepdims=True)
    out = (y - mean2) * lax.rsqrt(var2 + BN_EPS) * g2 + b2
    return jnp.transpose(out.reshape(B, H, W, dim), (0, 3, 1, 2))


if __name__ == "__main__":
    # ResAttnBlock(stage=2, patch_num=H*W, dim=128, ced=16):
    #   down_unit = 2**(stage-1) = 2, so c is (B, ced, 2H, 2W) and transform
    #   downsamples it to (B, dim, H, W). dim=128 keeps channels lane-dense.
    stage = 2
    du = 2 ** (stage - 1)
    B, dim, H, W = 2, 128, 8, 8
    ced = 16
    n = H * W
    Hc, Wc = H * du, W * du

    key = jax.random.PRNGKey(0)
    ks = jax.random.split(key, 10)

    params = dict(
        wt=jax.random.normal(ks[0], (du, du, ced, dim), jnp.float32) * 0.1,
        bt=jax.random.normal(ks[1], (dim,), jnp.float32) * 0.1,
        gamma1=1.0 + 0.1 * jax.random.normal(ks[2], (dim,), jnp.float32),
        beta1=0.1 * jax.random.normal(ks[3], (dim,), jnp.float32),
        wk=jax.random.normal(ks[4], (dim, dim), jnp.float32) / jnp.sqrt(dim),
        bk=jax.random.normal(ks[5], (dim,), jnp.float32) * 0.1,
        wv=jax.random.normal(ks[6], (dim, dim), jnp.float32) / jnp.sqrt(dim),
        bv=jax.random.normal(ks[7], (dim,), jnp.float32) * 0.1,
        gamma2=jnp.ones((dim,), jnp.float32),
        beta2=jnp.zeros((dim,), jnp.float32),
    )
    # TODO(synk): BatchNorm running_mean/running_var EMA buffer updates are not modeled
    # (forward uses training-mode batch statistics, matching the nn.Module output).

    x = jax.random.normal(ks[8], (B, dim, H, W), jnp.float32)
    c = jax.random.normal(ks[9], (B, ced, Hc, Wc), jnp.float32)

    out = res_attn_block(x, c, params, du=du)
    jax.block_until_ready(out)

    ref = reference(x, c, params, du=du)
    assert out.shape == (B, dim, H, W)
    assert jnp.allclose(out, ref, atol=2e-3, rtol=2e-3)

    print("KERNEL_OK")
</pallas_src>

<mosaic_0001>
module attributes {stable_mosaic.version = 11 : i64} {
  func.func @_transform_kernel(%arg0: i32, %arg1: memref<1x64x64xf32, #tpu.memory_space<vmem>>, %arg2: memref<64x128xf32, #tpu.memory_space<vmem>>, %arg3: memref<1x128xf32, #tpu.memory_space<vmem>>, %arg4: memref<1x64x128xf32, #tpu.memory_space<vmem>>, %arg5: memref<1x128xf32, #tpu.memory_space<vmem>>, %arg6: memref<1x128xf32, #tpu.memory_space<vmem>>) attributes {dimension_semantics = [#tpu.dimension_semantics<arbitrary>], iteration_bounds = array<i64: 2>, scalar_prefetch = 0 : i64, scratch_operands = 0 : i64, tpu.core_type = #tpu.core_type<tc>, window_params = [{transform_indices = @transform_0, window_bounds = array<i64: 1, 64, 64>}, {pipeline_mode = #tpu.pipeline_mode<synchronous>, transform_indices = @transform_1, window_bounds = array<i64: 64, 128>}, {pipeline_mode = #tpu.pipeline_mode<synchronous>, transform_indices = @transform_2, window_bounds = array<i64: 1, 128>}, {transform_indices = @transform_3, window_bounds = array<i64: 1, 64, 128>}, {pipeline_mode = #tpu.pipeline_mode<synchronous>, transform_indices = @transform_4, window_bounds = array<i64: 1, 128>}, {pipeline_mode = #tpu.pipeline_mode<synchronous>, transform_indices = @transform_5, window_bounds = array<i64: 1, 128>}]} {
    %c0 = arith.constant 0 : index
    %c0_0 = arith.constant 0 : index
    %c0_1 = arith.constant 0 : index
    %0 = vector.load %arg1[%c0, %c0_0, %c0_1] : memref<1x64x64xf32, #tpu.memory_space<vmem>>, vector<1x64x64xf32>
    %1 = vector.shape_cast %0 : vector<1x64x64xf32> to vector<64x64xf32>
    %c0_2 = arith.constant 0 : index
    %c0_3 = arith.constant 0 : index
    %2 = vector.load %arg2[%c0_2, %c0_3] : memref<64x128xf32, #tpu.memory_space<vmem>>, vector<64x128xf32>
    %cst = arith.constant dense<0.000000e+00> : vector<64x128xf32>
    %3 = tpu.matmul %1, %2, %cst {dimension_numbers = #tpu.dot_dimension_numbers<[1], [0], [0], [1], [0, 0, 1, 1], [], []>} : vector<64x64xf32>, vector<64x128xf32>, vector<64x128xf32> -> vector<64x128xf32>
    %c0_4 = arith.constant 0 : index
    %c0_5 = arith.constant 0 : index
    %4 = vector.load %arg3[%c0_4, %c0_5] : memref<1x128xf32, #tpu.memory_space<vmem>>, vector<1x128xf32>
    %5 = vector.broadcast %4 : vector<1x128xf32> to vector<64x128xf32>
    %6 = arith.addf %3, %5 : vector<64x128xf32>
    %cst_6 = arith.constant 2.000000e-01 : f32
    %7 = vector.broadcast %cst_6 : f32 to vector<64x128xf32>
    %8 = arith.mulf %7, %6 : vector<64x128xf32>
    %9 = arith.maximumf %6, %8 : vector<64x128xf32>
    %c0_7 = arith.constant 0 : index
    %c0_8 = arith.constant 0 : index
    %c0_9 = arith.constant 0 : index
    %10 = vector.load %arg4[%c0_7, %c0_8, %c0_9] : memref<1x64x128xf32, #tpu.memory_space<vmem>>, vector<1x64x128xf32>
    %11 = vector.shape_cast %10 : vector<1x64x128xf32> to vector<64x128xf32>
    %12 = vector.shape_cast %9 : vector<64x128xf32> to vector<1x64x128xf32>
    tpu.vector_store %arg4[%c0_7, %c0_8, %c0_9], %12 {strides = array<i32>} : memref<1x64x128xf32, #tpu.memory_space<vmem>>, vector<1x64x128xf32>,
    %c0_i32 = arith.constant 0 : i32
    %13 = arith.cmpi eq, %arg0, %c0_i32 : i32
    %14 = arith.extui %13 : i1 to i32
    %c0_i32_10 = arith.constant 0 : i32
    %15 = arith.cmpi ne, %14, %c0_i32_10 : i32
    scf.if %15 {
      %cst_21 = arith.constant 0.000000e+00 : f32
      %27 = vector.broadcast %cst_21 : f32 to vector<1x128xf32>
      %c0_22 = arith.constant 0 : index
      %c0_23 = arith.constant 0 : index
      %28 = vector.load %arg5[%c0_22, %c0_23] : memref<1x128xf32, #tpu.memory_space<vmem>>, vector<1x128xf32>
      tpu.vector_store %arg5[%c0_22, %c0_23], %27 {strides = array<i32>} : memref<1x128xf32, #tpu.memory_space<vmem>>, vector<1x128xf32>,
      %cst_24 = arith.constant 0.000000e+00 : f32
      %29 = vector.broadcast %cst_24 : f32 to vector<1x128xf32>
      %c0_25 = arith.constant 0 : index
      %c0_26 = arith.constant 0 : index
      %30 = vector.load %arg6[%c0_25, %c0_26] : memref<1x128xf32, #tpu.memory_space<vmem>>, vector<1x128xf32>
      tpu.vector_store %arg6[%c0_25, %c0_26], %29 {strides = array<i32>} : memref<1x128xf32, #tpu.memory_space<vmem>>, vector<1x128xf32>,
    } else {
    }
    %c0_11 = arith.constant 0 : index
    %c0_12 = arith.constant 0 : index
    %16 = vector.load %arg5[%c0_11, %c0_12] : memref<1x128xf32, #tpu.memory_space<vmem>>, vector<1x128xf32>
    %cst_13 = arith.constant dense<0.000000e+00> : vector<128xf32>
    %17 = vector.multi_reduction <add>, %9, %cst_13 [0] : vector<64x128xf32> to vector<128xf32>
    %18 = vector.shape_cast %17 : vector<128xf32> to vector<1x128xf32>
    %19 = arith.addf %16, %18 : vector<1x128xf32>
    %c0_14 = arith.constant 0 : index
    %c0_15 = arith.constant 0 : index
    %20 = vector.load %arg5[%c0_14, %c0_15] : memref<1x128xf32, #tpu.memory_space<vmem>>, vector<1x128xf32>
    tpu.vector_store %arg5[%c0_14, %c0_15], %19 {strides = array<i32>} : memref<1x128xf32, #tpu.memory_space<vmem>>, vector<1x128xf32>,
    %c0_16 = arith.constant 0 : index
    %c0_17 = arith.constant 0 : index
    %21 = vector.load %arg6[%c0_16, %c0_17] : memref<1x128xf32, #tpu.memory_space<vmem>>, vector<1x128xf32>
    %22 = arith.mulf %9, %9 : vector<64x128xf32>
    %cst_18 = arith.constant dense<0.000000e+00> : vector<128xf32>
    %23 = vector.multi_reduction <add>, %22, %cst_18 [0] : vector<64x128xf32> to vector<128xf32>
    %24 = vector.shape_cast %23 : vector<128xf32> to vector<1x128xf32>
    %25 = arith.addf %21, %24 : vector<1x128xf32>
    %c0_19 = arith.constant 0 : index
    %c0_20 = arith.constant 0 : index
    %26 = vector.load %arg6[%c0_19, %c0_20] : memref<1x128xf32, #tpu.memory_space<vmem>>, vector<1x128xf32>
    tpu.vector_store %arg6[%c0_19, %c0_20], %25 {strides = array<i32>} : memref<1x128xf32, #tpu.memory_space<vmem>>, vector<1x128xf32>,
    return
  }
  func.func @transform_0(%arg0: i32) -> (i32, i32, i32) {
    %c0_i32 = arith.constant 0 : i32
    %c0_i32_0 = arith.constant 0 : i32
    %c0_i32_1 = arith.constant 0 : i32
    return %arg0, %c0_i32, %c0_i32_0 : i32, i32, i32
  }
  func.func @transform_1(%arg0: i32) -> (i32, i32) {
    %c0_i32 = arith.constant 0 : i32
    %c0_i32_0 = arith.constant 0 : i32
    %c0_i32_1 = arith.constant 0 : i32
    return %c0_i32, %c0_i32_0 : i32, i32
  }
  func.func @transform_2(%arg0: i32) -> (i32, i32) {
    %c0_i32 = arith.constant 0 : i32
    %c0_i32_0 = arith.constant 0 : i32
    %c0_i32_1 = arith.constant 0 : i32
    return %c0_i32, %c0_i32_0 : i32, i32
  }
  func.func @transform_3(%arg0: i32) -> (i32, i32, i32) {
    %c0_i32 = arith.constant 0 : i32
    %c0_i32_0 = arith.constant 0 : i32
    %c0_i32_1 = arith.constant 0 : i32
    return %arg0, %c0_i32, %c0_i32_0 : i32, i32, i32
  }
  func.func @transform_4(%arg0: i32) -> (i32, i32) {
    %c0_i32 = arith.constant 0 : i32
    %c0_i32_0 = arith.constant 0 : i32
    %c0_i32_1 = arith.constant 0 : i32
    return %c0_i32, %c0_i32_0 : i32, i32
  }
  func.func @transform_5(%arg0: i32) -> (i32, i32) {
    %c0_i32 = arith.constant 0 : i32
    %c0_i32_0 = arith.constant 0 : i32
    %c0_i32_1 = arith.constant 0 : i32
    return %c0_i32, %c0_i32_0 : i32, i32
  }
}

</mosaic_0001>

<llo_original>
// kernel: tpu_custom_call.1
$region0: #{tpu_custom_call.1}
  #allocation0 [shape = 'u32[]', space=smem, size = 0x4, offset = 0x4, fixed_abs, tag = 'smem constant byte address 0x4 - core index']
  #allocation1 [shape = 'u32[72,128]{1,0:T(1,128)}', space=vmem, size = 0x9000, scoped, tag = 'internal scratch']
  %s0 = inlined_call_operand.hbm [shape: f32[2,64,64], index: 0, kind: input, shape index: {}]
  %s1 = inlined_call_operand.hbm [shape: f32[64,128], index: 1, kind: input, shape index: {}]
  %s2 = inlined_call_operand.vmem [shape: f32[1,128], index: 2, kind: input, shape index: {}]
  %s3 = inlined_call_operand.hbm [shape: f32[2,64,128], index: 3, kind: output, shape index: {0}]
  %s4 = inlined_call_operand.hbm [shape: f32[1,128], index: 4, kind: output, shape index: {1}]
  %s5 = inlined_call_operand.hbm [shape: f32[1,128], index: 5, kind: output, shape index: {2}]
  %6 = xla_tuple %s3, %s4, %s5
  %s7 = sld [smem:[#allocation0]]
  $region73: #{tpu_custom_call.1} parent=0
    _
  %s9 = ssub.s32 1, %s7
  %s10 = scalar_select 0, %s9, %s7
  $region1: #{tpu_custom_call.1} parent=0
    #allocation2 [shape = 'u8[65536]{0}', space=vmem, size = 0x10000, scoped, tag = 'input window, operand 0']
    #allocation3 [shape = 's32[2]{0}', space=sflag, size = 0x8, scoped, tag = 'scoped memory for tpu_custom_call.1']
    #allocation4 [shape = 's32[2]{0}', space=sflag, size = 0x8, scoped, tag = 'scoped memory for tpu_custom_call.1']
    #allocation5 [shape = 'u8[32768]{0}', space=vmem, size = 0x8000, scoped, tag = 'input window, operand 1, single buffered']
    #allocation6 [shape = 's32[1]{0}', space=sflag, size = 0x4, scoped, tag = 'scoped memory for tpu_custom_call.1']
    #allocation7 [shape = 'u8[65536]{0}', space=vmem, size = 0x10000, scoped, tag = 'output window, operand 0']
    #allocation8 [shape = 'u8[512]{0}', space=vmem, size = 0x400, scoped, tag = 'output window, operand 1, single buffered']
    #allocation9 [shape = 's32[1]{0}', space=sflag, size = 0x4, scoped, tag = 'scoped memory for tpu_custom_call.1']
    #allocation10 [shape = 'u8[512]{0}', space=vmem, size = 0x400, scoped, tag = 'output window, operand 2, single buffered']
    %11 = vsyncpa [#allocation3], 0
    %s12 = scalar_lea.sflag [#allocation3], 1
    %13 = vsyncpa %s12, 0
    %14 = vsyncpa [#allocation6], 0
    %15 = vsyncpa [#allocation4], 0
    %s16 = scalar_lea.sflag [#allocation4], 1
    %17 = vsyncpa %s16, 0
    %18 = vsyncpa [#allocation9], 0
    loop: start=0, step=1, limit=4
    $region2: #{tpu_custom_call.1} parent=1 // loop_pre_header
      _
    $region3: #{tpu_custom_call.1} parent=1 // loop_header
      %s20 = sphi 0, %s24
      %p21 = scmp.ge.s32.totalorder %s20, 4
      %s30 = sphi 0, %s32
      %s33 = sphi 0, %s30
      %s34 = sphi 0, %s33
      %s50 = sphi 0, %s34
      %s54 = sphi 0, %s54
      %s56 = sphi 0, %s54
      %s57 = sphi 0, %s56
      %s71 = sphi 0, %s57
      %s75 = sphi 0, %s75
      %s77 = sphi 0, %s75
      %s78 = sphi 0, %s77
      %s92 = sphi 0, %s78
      %s98 = sphi 0, %s100
      %s101 = sphi 0, %s98
      %s102 = sphi 0, %s101
      %s118 = sphi 0, %s102
      %s122 = sphi 0, %s122
      %s124 = sphi 0, %s122
      %s125 = sphi 0, %s124
      %s139 = sphi 0, %s125
      %s143 = sphi 0, %s143
      %s145 = sphi 0, %s143
      %s146 = sphi 0, %s145
      %s160 = sphi 0, %s146
    $region4: #{tpu_custom_call.1} parent=1 // loop_header_branch
      %23 = sbr.rel (%p21) target = $region8
    $region5: #{tpu_custom_call.1} parent=1 // loop_body
      %s25 = ssub.s32 %s20, 1
      %s26 = ssub.s32 %s20, 2
      %s27 = sadd.s32 %s20, 1
      %s28 = ssub.s32 %s20, %s27
      %p29 = scmp.eq.s32.totalorder %s28, 0
      %s31 = sadd.s32 %s30, 1
      %s32 = scalar_select %p29, %s30, %s31
      %p35 = pneg %p29
      %p36 = scmp.eq.s32.totalorder %s20, 1
      %p37 = por %p35, %p36
      %p38 = scmp.ne.s32.totalorder %s30, %s33
      %p39 = scmp.eq.s32.totalorder %s20, 0
      %p40 = por %p38, %p39
      %p41 = scmp.ne.s32.totalorder %s30, %s33
      %p42 = scmp.eq.s32.totalorder %s25, 1
      %p43 = por %p41, %p42
      %p44 = scmp.ne.s32.totalorder %s33, %s34
      %p45 = scmp.eq.s32.totalorder %s25, 0
      %p46 = por %p44, %p45
      %p47 = scmp.ne.s32.totalorder %s33, %s34
      %p48 = scmp.eq.s32.totalorder %s26, 1
      %p49 = por %p47, %p48
      %p51 = scmp.ne.s32.totalorder %s34, %s50
      %p52 = scmp.eq.s32.totalorder %s26, 0
      %p53 = por %p51, %p52
      %s55 = sadd.s32 %s54, 1
      %p58 = scmp.eq.s32.totalorder %s20, 1
      %p59 = scmp.ne.s32.totalorder %s54, %s56
      %p60 = scmp.eq.s32.totalorder %s20, 0
      %p61 = por %p59, %p60
      %p62 = scmp.ne.s32.totalorder %s54, %s56
      %p63 = scmp.eq.s32.totalorder %s25, 1
      %p64 = por %p62, %p63
      %p65 = scmp.ne.s32.totalorder %s56, %s57
      %p66 = scmp.eq.s32.totalorder %s25, 0
      %p67 = por %p65, %p66
      %p68 = scmp.ne.s32.totalorder %s56, %s57
      %p69 = scmp.eq.s32.totalorder %s26, 1
      %p70 = por %p68, %p69
      %p72 = scmp.ne.s32.totalorder %s57, %s71
      %p73 = scmp.eq.s32.totalorder %s26, 0
      %p74 = por %p72, %p73
      %s76 = sadd.s32 %s75, 1
      %p79 = scmp.eq.s32.totalorder %s20, 1
      %p80 = scmp.ne.s32.totalorder %s75, %s77
      %p81 = scmp.eq.s32.totalorder %s20, 0
      %p82 = por %p80, %p81
      %p83 = scmp.ne.s32.totalorder %s75, %s77
      %p84 = scmp.eq.s32.totalorder %s25, 1
      %p85 = por %p83, %p84
      %p86 = scmp.ne.s32.totalorder %s77, %s78
      %p87 = scmp.eq.s32.totalorder %s25, 0
      %p88 = por %p86, %p87
      %p89 = scmp.ne.s32.totalorder %s77, %s78
      %p90 = scmp.eq.s32.totalorder %s26, 1
      %p91 = por %p89, %p90
      %p93 = scmp.ne.s32.totalorder %s78, %s92
      %p94 = scmp.eq.s32.totalorder %s26, 0
      %p95 = por %p93, %p94
      %s96 = ssub.s32 %s20, %s27
      %p97 = scmp.eq.s32.totalorder %s96, 0
      %s99 = sadd.s32 %s98, 1
      %s100 = scalar_select %p97, %s98, %s99
      %p103 = pneg %p97
      %p104 = scmp.eq.s32.totalorder %s20, 1
      %p105 = por %p103, %p104
      %p106 = scmp.ne.s32.totalorder %s98, %s101
      %p107 = scmp.eq.s32.totalorder %s20, 0
      %p108 = por %p106, %p107
      %p109 = scmp.ne.s32.totalorder %s98, %s101
      %p110 = scmp.eq.s32.totalorder %s25, 1
      %p111 = por %p109, %p110
      %p112 = scmp.ne.s32.totalorder %s101, %s102
      %p113 = scmp.eq.s32.totalorder %s25, 0
      %p114 = por %p112, %p113
      %p115 = scmp.ne.s32.totalorder %s101, %s102
      %p116 = scmp.eq.s32.totalorder %s26, 1
      %p117 = por %p115, %p116
      %p119 = scmp.ne.s32.totalorder %s102, %s118
      %p120 = scmp.eq.s32.totalorder %s26, 0
      %p121 = por %p119, %p120
      %s123 = sadd.s32 %s122, 1
      %p126 = scmp.eq.s32.totalorder %s20, 1
      %p127 = scmp.ne.s32.totalorder %s122, %s124
      %p128 = scmp.eq.s32.totalorder %s20, 0
      %p129 = por %p127, %p128
      %p130 = scmp.ne.s32.totalorder %s122, %s124
      %p131 = scmp.eq.s32.totalorder %s25, 1
      %p132 = por %p130, %p131
      %p133 = scmp.ne.s32.totalorder %s124, %s125
      %p134 = scmp.eq.s32.totalorder %s25, 0
      %p135 = por %p133, %p134
      %p136 = scmp.ne.s32.totalorder %s124, %s125
      %p137 = scmp.eq.s32.totalorder %s26, 1
      %p138 = por %p136, %p137
      %p140 = scmp.ne.s32.totalorder %s125, %s139
      %p141 = scmp.eq.s32.totalorder %s26, 0
      %p142 = por %p140, %p141
      %s144 = sadd.s32 %s143, 1
      %p147 = scmp.eq.s32.totalorder %s20, 1
      %p148 = scmp.ne.s32.totalorder %s143, %s145
      %p149 = scmp.eq.s32.totalorder %s20, 0
      %p150 = por %p148, %p149
      %p151 = scmp.ne.s32.totalorder %s143, %s145
      %p152 = scmp.eq.s32.totalorder %s25, 1
      %p153 = por %p151, %p152
      %p154 = scmp.ne.s32.totalorder %s145, %s146
      %p155 = scmp.eq.s32.totalorder %s25, 0
      %p156 = por %p154, %p155
      %p157 = scmp.ne.s32.totalorder %s145, %s146
      %p158 = scmp.eq.s32.totalorder %s26, 1
      %p159 = por %p157, %p158
      %p161 = scmp.ne.s32.totalorder %s146, %s160
      %p162 = scmp.eq.s32.totalorder %s26, 0
      %p163 = por %p161, %p162
      %p164 = scmp.le.s32.totalorder 1, %s20
      %p165 = scmp.lt.s32.totalorder %s20, 3
      %p166 = pnand %p164, %p165
      %p167 = pneg %p166
      // Predicated region
      $region9: #{tpu_custom_call.1} parent=5 // pred_check
        _
      $region10: #{tpu_custom_call.1} parent=5 // pred_check_branch
        %169 = sbr.rel (%p166) target = $region12
      $region11: #{tpu_custom_call.1} parent=5 // pred_region
        %s170 = ssub.s32 %s20, 1
        // Predicated region
        $region13: #{tpu_custom_call.1} parent=11 // pred_check
          %p171 = pneg %p67
        $region14: #{tpu_custom_call.1} parent=11 // pred_check_branch
          %173 = sbr.rel (%p171) target = $region16
        $region15: #{tpu_custom_call.1} parent=11 // pred_region
          %175 = vsyncadd [#allocation6], 0
          %s176 = sshll.u32 %s1, 4
          %s177 = int_to_ptr.hbm [resolvable:$true] %s176
          %s178 = sshll.u32 [#allocation5], 4
          %s179 = int_to_ptr.vmem [resolvable:$true] %s178
          %184 = dma.hbm_to_vmem [thread:$0]  %s177, 1024, %s179, [#allocation6], 128, 128, 8
        $region16: #{tpu_custom_call.1} parent=11 // pred_fallthru
          _
        // Predicated region
        $region17: #{tpu_custom_call.1} parent=11 // pred_check
          %p185 = pneg %p88
        $region18: #{tpu_custom_call.1} parent=11 // pred_check_branch
          %187 = sbr.rel (%p185) target = $region20
        $region19: #{tpu_custom_call.1} parent=11 // pred_region
          _
        $region20: #{tpu_custom_call.1} parent=11 // pred_fallthru
          _
      $region12: #{tpu_custom_call.1} parent=5 // pred_fallthru
        _
      %p188 = scmp.lt.s32.totalorder %s20, 2
      // Predicated region
      $region21: #{tpu_custom_call.1} parent=5 // pred_check
        %p189 = pneg %p188
      $region22: #{tpu_custom_call.1} parent=5 // pred_check_branch
        %191 = sbr.rel (%p189) target = $region24
      $region23: #{tpu_custom_call.1} parent=5 // pred_region
        // Predicated region
        $region25: #{tpu_custom_call.1} parent=23 // pred_check
          %p192 = pneg %p40
        $region26: #{tpu_custom_call.1} parent=23 // pred_check_branch
          %194 = sbr.rel (%p192) target = $region28
        $region27: #{tpu_custom_call.1} parent=23 // pred_region
          %s195 = sand.u32 %s30, 1
          %s196 = scalar_lea.sflag [#allocation3], %s195
          %s197 = sand.u32 %s30, 1
          %s198 = smul.addr %s197, 64
          %s199 = scalar_lea.vmem [#allocation2], %s198
          %201 = vsyncadd %s196, 0
          %s202 = smul.addr %s20, 8
          %s203 = smul.addr %s202, 8
          %s204 = scalar_lea.hbm %s0, %s203
          %s205 = sshll.u32 %s204, 4
          %s206 = int_to_ptr.hbm [resolvable:$true] %s205
          %s207 = sshll.u32 %s199, 4
          %s208 = int_to_ptr.vmem [resolvable:$true] %s207
          %213 = dma.hbm_to_vmem [thread:$0]  %s206, 1024, %s208, %s196, 128, 128, 8
        $region28: #{tpu_custom_call.1} parent=23 // pred_fallthru
          _
      $region24: #{tpu_custom_call.1} parent=5 // pred_fallthru
        _
      %p214 = scmp.le.s32.totalorder 1, %s20
      %p215 = scmp.lt.s32.totalorder %s20, 3
      %p216 = pnand %p214, %p215
      %p217 = pneg %p216
      // Predicated region
      $region29: #{tpu_custom_call.1} parent=5 // pred_check
        _
      $region30: #{tpu_custom_call.1} parent=5 // pred_check_branch
        %219 = sbr.rel (%p216) target = $region32
      $region31: #{tpu_custom_call.1} parent=5 // pred_region
        %s220 = ssub.s32 %s20, 1
        %s221 = sand.u32 %s33, 1
        %s222 = scalar_lea.sflag [#allocation3], %s221
        %s223 = sand.u32 %s33, 1
        %s224 = smul.addr %s223, 64
        %s225 = scalar_lea.vmem [#allocation2], %s224
        // Predicated region
        $region33: #{tpu_custom_call.1} parent=31 // pred_check
          %p226 = pneg %p46
        $region34: #{tpu_custom_call.1} parent=31 // pred_check_branch
          %228 = sbr.rel (%p226) target = $region36
        $region35: #{tpu_custom_call.1} parent=31 // pred_region
          %230 = dma.done %s222, 1024
        $region36: #{tpu_custom_call.1} parent=31 // pred_fallthru
          _
        // Predicated region
        $region37: #{tpu_custom_call.1} parent=31 // pred_check
          %p231 = pneg %p67
        $region38: #{tpu_custom_call.1} parent=31 // pred_check_branch
          %233 = sbr.rel (%p231) target = $region40
        $region39: #{tpu_custom_call.1} parent=31 // pred_region
          %235 = dma.done [#allocation6], 1024
        $region40: #{tpu_custom_call.1} parent=31 // pred_fallthru
          _
        %s236 = sand.u32 %s33, 1
        %s237 = scalar_lea.sflag [#allocation3], %s236
        %s238 = sand.u32 %s33, 1
        %s239 = smul.addr %s238, 64
        %s240 = scalar_lea.vmem [#allocation2], %s239
        %p241 = pneg %p46
        %p242 = pneg %p43
        %p243 = pneg %p67
        %p244 = pneg %p64
        %p245 = pneg %p88
        %p246 = pneg %p85
        %p247 = pneg %p114
        %p248 = pneg %p111
        %s249 = sand.u32 %s101, 1
        %s250 = scalar_lea.sflag [#allocation4], %s249
        %s251 = sand.u32 %s101, 1
        %s252 = smul.addr %s251, 64
        %s253 = scalar_lea.vmem [#allocation7], %s252
        %p254 = pneg %p135
        %p255 = pneg %p132
        %p256 = pneg %p156
        %p257 = pneg %p153
        %v258 = vld [vmem:[%s225] sm:$0xff]
        %v259 = vld [vmem:[%s225 + $0x8] sm:$0xff]
        %v260 = vld [vmem:[%s225 + $0x10] sm:$0xff]
        %v261 = vld [vmem:[%s225 + $0x18] sm:$0xff]
        %v262 = vld [vmem:[%s225 + $0x20] sm:$0xff]
        %v263 = vld [vmem:[%s225 + $0x28] sm:$0xff]
        %v264 = vld [vmem:[%s225 + $0x30] sm:$0xff]
        %v265 = vld [vmem:[%s225 + $0x38] sm:$0xff]
        %v266 = vld [vmem:[#allocation5] sm:$0xff]
        %v267 = vld [vmem:[#allocation5 + $0x8] sm:$0xff]
        %v268 = vld [vmem:[#allocation5 + $0x10] sm:$0xff]
        %v269 = vld [vmem:[#allocation5 + $0x18] sm:$0xff]
        %v270 = vld [vmem:[#allocation5 + $0x20] sm:$0xff]
        %v271 = vld [vmem:[#allocation5 + $0x28] sm:$0xff]
        %v272 = vld [vmem:[#allocation5 + $0x30] sm:$0xff]
        %v273 = vld [vmem:[#allocation5 + $0x38] sm:$0xff]
        %v274 = vld [vmem:[%s2] sm:$0x1]
        %v276 = vperm.slane %v274, 0
        %vm278 = vcmask 523264
        %v280 = vsel %vm278, %v258, 0
        %v283 = vsel %vm278, %v259, 0
        %v286 = vsel %vm278, %v260, 0
        %v289 = vsel %vm278, %v261, 0
        %v292 = vsel %vm278, %v262, 0
        %v295 = vsel %vm278, %v263, 0
        %v298 = vsel %vm278, %v264, 0
        %v301 = vsel %vm278, %v265, 0
        %303 = vmatpush.msra.mxu0 0.0
        %304 = vmatpush.msra.mxu0 0.0
        %305 = vmatpush.msra.mxu0 0.0
        %306 = vmatpush.msra.mxu0 0.0
        %307 = vmatpush.msra.mxu0 0.0
        %308 = vmatpush.msra.mxu0 0.0
        %309 = vmatpush.msra.mxu0 0.0
        %310 = vmatpush.msra.mxu0 0.0
        %311 = vmatpush.msra.mxu0 %v273
        %312 = vmatpush.msra.mxu0 %v272
        %313 = vmatpush.msra.mxu0 %v271
        %314 = vmatpush.msra.mxu0 %v270
        %315 = vmatpush.msra.mxu0 %v269
        %316 = vmatpush.msra.mxu0 %v268
        %317 = vmatpush.msra.mxu0 %v267
        %318 = vmatpush.msra.mxu0 %v266
        %319 = vmatmul.f32.gmra.mxu0 %v280
        %v320 = vpop.f32.mrf.mxu0
        %v321 = vadd.f32 %v276, %v320
        %322 = vmatmul.f32.gmra.mxu0 %v283
        %v323 = vpop.f32.mrf.mxu0
        %v324 = vadd.f32 %v276, %v323
        %325 = vmatmul.f32.gmra.mxu0 %v286
        %v326 = vpop.f32.mrf.mxu0
        %v327 = vadd.f32 %v276, %v326
        %328 = vmatmul.f32.gmra.mxu0 %v289
        %v329 = vpop.f32.mrf.mxu0
        %v330 = vadd.f32 %v276, %v329
        %331 = vmatmul.f32.gmra.mxu0 %v292
        %v332 = vpop.f32.mrf.mxu0
        %v333 = vadd.f32 %v276, %v332
        %334 = vmatmul.f32.gmra.mxu0 %v295
        %v335 = vpop.f32.mrf.mxu0
        %v336 = vadd.f32 %v276, %v335
        %337 = vmatmul.f32.gmra.mxu0 %v298
        %v338 = vpop.f32.mrf.mxu0
        %v339 = vadd.f32 %v276, %v338
        %340 = vmatmul.f32.gmra.mxu0 %v301
        %v341 = vpop.f32.mrf.mxu0
        %v342 = vadd.f32 %v276, %v341
        %343 = vdwg.mxu0
        %v344 = vmul.f32 %v321, 0.2
        %v345 = vmul.f32 %v324, 0.2
        %v346 = vmul.f32 %v327, 0.2
        %v347 = vmul.f32 %v330, 0.2
        %v348 = vmul.f32 %v333, 0.2
        %v349 = vmul.f32 %v336, 0.2
        %v350 = vmul.f32 %v339, 0.2
        %v351 = vmul.f32 %v342, 0.2
        %v352 = vmax.f32 %v321, %v344
        %v353 = vmax.f32 %v324, %v345
        %v354 = vmax.f32 %v327, %v346
        %v355 = vmax.f32 %v330, %v347
        %v356 = vmax.f32 %v333, %v348
        %v357 = vmax.f32 %v336, %v349
        %v358 = vmax.f32 %v339, %v350
        %v359 = vmax.f32 %v342, %v351
        %360 = vst [vmem:[%s253] sm:$0xff] %v352
        %361 = vst [vmem:[%s253 + $0x8] sm:$0xff] %v353
        %362 = vst [vmem:[%s253 + $0x10] sm:$0xff] %v354
        %363 = vst [vmem:[%s253 + $0x18] sm:$0xff] %v355
        %364 = vst [vmem:[%s253 + $0x20] sm:$0xff] %v356
        %365 = vst [vmem:[%s253 + $0x28] sm:$0xff] %v357
        %366 = vst [vmem:[%s253 + $0x30] sm:$0xff] %v358
        %367 = vst [vmem:[%s253 + $0x38] sm:$0xff] %v359
        %p368 = scmp.eq.s32.totalorder %s25, 0
        // Predicated region
        $region41: #{tpu_custom_call.1} parent=31 // pred_check
          %p369 = pneg %p368
        $region42: #{tpu_custom_call.1} parent=31 // pred_check_branch
          %371 = sbr.rel (%p369) target = $region44
        $region43: #{tpu_custom_call.1} parent=31 // pred_region
          %372 = vst [vmem:[#allocation8] sm:$0x1] 0.0
          %373 = vst [vmem:[#allocation10] sm:$0x1] 0.0
        $region44: #{tpu_custom_call.1} parent=31 // pred_fallthru
          _
        %v374 = vld [vmem:[#allocation8] sm:$0x1]
        %v375 = vadd.f32 %v352, %v353
        %v376 = vadd.f32 %v375, %v354
        %v377 = vadd.f32 %v376, %v355
        %v378 = vadd.f32 %v377, %v356
        %v379 = vadd.f32 %v378, %v357
        %v380 = vadd.f32 %v379, %v358
        %v381 = vadd.f32 %v380, %v359
        %v382 = vrot.slane %v381, 4
        %v383 = vadd.f32 %v381, %v382
        %v384 = vrot.slane %v383, 2
        %v385 = vadd.f32 %v383, %v384
        %v386 = vrot.slane %v385, 1
        %v387 = vadd.f32 %v385, %v386
        %v388 = vadd.f32 %v374, %v387
        %389 = vst [vmem:[#allocation8] sm:$0x1] %v388
        %v390 = vld [vmem:[#allocation10] sm:$0x1]
        %v391 = vmul.f32 %v352, %v352
        %v392 = vmul.f32 %v353, %v353
        %v393 = vmul.f32 %v354, %v354
        %v394 = vmul.f32 %v355, %v355
        %v395 = vmul.f32 %v356, %v356
        %v396 = vmul.f32 %v357, %v357
        %v397 = vmul.f32 %v358, %v358
        %v398 = vmul.f32 %v359, %v359
        %v399 = vadd.f32 %v391, %v392
        %v400 = vadd.f32 %v399, %v393
        %v401 = vadd.f32 %v400, %v394
        %v402 = vadd.f32 %v401, %v395
        %v403 = vadd.f32 %v402, %v396
        %v404 = vadd.f32 %v403, %v397
        %v405 = vadd.f32 %v404, %v398
        %v406 = vrot.slane %v405, 4
        %v407 = vadd.f32 %v405, %v406
        %v408 = vrot.slane %v407, 2
        %v409 = vadd.f32 %v407, %v408
        %v410 = vrot.slane %v409, 1
        %v411 = vadd.f32 %v409, %v410
        %v412 = vadd.f32 %v390, %v411
        %413 = vst [vmem:[#allocation10] sm:$0x1] %v412
        %s414 = sand.u32 %s101, 1
        %s415 = scalar_lea.sflag [#allocation4], %s414
        %s416 = sand.u32 %s101, 1
        %s417 = smul.addr %s416, 64
        %s418 = scalar_lea.vmem [#allocation7], %s417
        // Predicated region
        $region45: #{tpu_custom_call.1} parent=31 // pred_check
          %p419 = pneg %p111
        $region46: #{tpu_custom_call.1} parent=31 // pred_check_branch
          %421 = sbr.rel (%p419) target = $region48
        $region47: #{tpu_custom_call.1} parent=31 // pred_region
          %423 = vsyncadd %s415, 0
          %s424 = smul.addr %s25, 8
          %s425 = smul.addr %s424, 8
          %s426 = scalar_lea.hbm %s3, %s425
          %s427 = sshll.u32 %s418, 4
          %s428 = int_to_ptr.vmem [resolvable:$true] %s427
          %s429 = sshll.u32 %s426, 4
          %s430 = int_to_ptr.hbm [resolvable:$true] %s429
          %435 = dma.vmem_to_hbm [thread:$0]  %s428, 1024, %s430, %s415, 128, 128, 8
        $region48: #{tpu_custom_call.1} parent=31 // pred_fallthru
          _
        // Predicated region
        $region49: #{tpu_custom_call.1} parent=31 // pred_check
          %p436 = pneg %p132
        $region50: #{tpu_custom_call.1} parent=31 // pred_check_branch
          %438 = sbr.rel (%p436) target = $region52
        $region51: #{tpu_custom_call.1} parent=31 // pred_region
          %440 = vsyncadd [#allocation9], 0
          %s442 = sshll.u32 [#allocation8], 4
          %s443 = int_to_ptr.vmem [resolvable:$true] %s442
          %s444 = sshll.u32 %s4, 4
          %s445 = int_to_ptr.hbm [resolvable:$true] %s444
          %447 = dma.vmem_to_hbm [thread:$0]  %s443, 16, %s445, [#allocation9]
        $region52: #{tpu_custom_call.1} parent=31 // pred_fallthru
          _
        // Predicated region
        $region53: #{tpu_custom_call.1} parent=31 // pred_check
          %p448 = pneg %p153
        $region54: #{tpu_custom_call.1} parent=31 // pred_check_branch
          %450 = sbr.rel (%p448) target = $region56
        $region55: #{tpu_custom_call.1} parent=31 // pred_region
          %452 = vsyncadd [#allocation9], 0
          %s454 = sshll.u32 [#allocation10], 4
          %s455 = int_to_ptr.vmem [resolvable:$true] %s454
          %s456 = sshll.u32 %s5, 4
          %s457 = int_to_ptr.hbm [resolvable:$true] %s456
          %459 = dma.vmem_to_hbm [thread:$0]  %s455, 16, %s457, [#allocation9]
        $region56: #{tpu_custom_call.1} parent=31 // pred_fallthru
          _
        // Predicated region
        $region57: #{tpu_custom_call.1} parent=31 // pred_check
          %p460 = pneg %p132
        $region58: #{tpu_custom_call.1} parent=31 // pred_check_branch
          %462 = sbr.rel (%p460) target = $region60
        $region59: #{tpu_custom_call.1} parent=31 // pred_region
          %464 = dma.done [#allocation9], 16
        $region60: #{tpu_custom_call.1} parent=31 // pred_fallthru
          _
        // Predicated region
        $region61: #{tpu_custom_call.1} parent=31 // pred_check
          %p465 = pneg %p153
        $region62: #{tpu_custom_call.1} parent=31 // pred_check_branch
          %467 = sbr.rel (%p465) target = $region64
        $region63: #{tpu_custom_call.1} parent=31 // pred_region
          %469 = dma.done [#allocation9], 16
        $region64: #{tpu_custom_call.1} parent=31 // pred_fallthru
          _
      $region32: #{tpu_custom_call.1} parent=5 // pred_fallthru
        _
      %p470 = scmp.le.s32.totalorder 2, %s20
      // Predicated region
      $region65: #{tpu_custom_call.1} parent=5 // pred_check
        %p471 = pneg %p470
      $region66: #{tpu_custom_call.1} parent=5 // pred_check_branch
        %473 = sbr.rel (%p471) target = $region68
      $region67: #{tpu_custom_call.1} parent=5 // pred_region
        %s474 = ssub.s32 %s20, 2
        // Predicated region
        $region69: #{tpu_custom_call.1} parent=67 // pred_check
          %p475 = pneg %p117
        $region70: #{tpu_custom_call.1} parent=67 // pred_check_branch
          %477 = sbr.rel (%p475) target = $region72
        $region71: #{tpu_custom_call.1} parent=67 // pred_region
          %s478 = sand.u32 %s102, 1
          %s479 = scalar_lea.sflag [#allocation4], %s478
          %s480 = sand.u32 %s102, 1
          %s481 = smul.addr %s480, 64
          %s482 = scalar_lea.vmem [#allocation7], %s481
          %484 = dma.done %s479, 1024
        $region72: #{tpu_custom_call.1} parent=67 // pred_fallthru
          _
      $region68: #{tpu_custom_call.1} parent=5 // pred_fallthru
        _
    $region6: #{tpu_custom_call.1} parent=1 // loop_footer
      %s24 = sadd.s32 1, %s20
    $region7: #{tpu_custom_call.1} parent=1 // loop_footer_branch
      %19 = sbr.rel target = $region3
    $region8: #{tpu_custom_call.1} parent=1 // loop_exit
      _
    %485 = vsyncpa [#allocation3], 1
    %s486 = scalar_lea.sflag [#allocation3], 1
    %487 = vsyncpa %s486, 1
    %488 = vsyncpa [#allocation6], 1
    %489 = vsyncpa [#allocation4], 1
    %s490 = scalar_lea.sflag [#allocation4], 1
    %491 = vsyncpa %s490, 1
    %492 = vsyncpa [#allocation9], 1

</llo_original>
